<compile_context>
chip_gen: v5e
topology: v5e:2x2
jax: 0.10.0
libtpu: 0.0.40
codegen_flags: <defaults>
</compile_context>

<pallas_src>
import jax
import jax.numpy as jnp
import numpy as np
from jax.experimental import pallas as pl
from jax.experimental.pallas import tpu as pltpu

KSIZE = 5    # Conv1d kernel size
PAD = 4      # the module prepends 4 zero time-steps
LANE = 128   # TPU lane width


def _round_up(x, m):
    return (x + m - 1) // m * m


def ncnn_kernel(x_ref, wlin_ref, blin_ref, wstack_ref, bconv_ref, o_ref):
    """One block of Bb batch elements per grid step.

    x_ref     : (Bb, L, E)       bf16 input embeddings
    wlin_ref  : (E, Hp)          bf16 Linear weight (in, out), zero-padded to Hp lanes
    blin_ref  : (1, Hp)          f32  Linear bias (zero-padded)
    wstack_ref: (KSIZE*Hp, Hp)   bf16 im2col-stacked conv weights; rows
                                 [k*Hp:(k+1)*Hp] hold conv_weight[:, :, k].T (padded)
    bconv_ref : (1, Hp)          f32  conv bias (zero-padded)
    o_ref     : (Bb, L, Hp)      output (lane-dense; padding sliced off outside)
    """
    Bb, L, _ = x_ref.shape
    Hp = o_ref.shape[-1]

    # Linear transfer: one MXU matmul over all Bb*L rows (bf16 in, f32 accumulate),
    # bias add in f32.
    h = jnp.einsum("ble,eh->blh", x_ref[...], wlin_ref[...],
                   preferred_element_type=jnp.float32)
    h = h + blin_ref[...]                                        # (Bb, L, Hp) f32

    # Zero-left-pad 4 time-steps (== torch.cat([zeros(B,4,H), vec], dim=1)) and
    # build the im2col slab once: lane block k of P is padded[:, k:k+L, :].
    padded = jnp.concatenate(
        [jnp.zeros((Bb, PAD, Hp), jnp.float32), h], axis=1)      # (Bb, L+4, Hp)
    p = jnp.concatenate(
        [padded[:, k:k + L, :] for k in range(KSIZE)], axis=-1)  # (Bb, L, 5*Hp)

    # Conv1d(kernel_size=5, valid) as a single MXU matmul with K = 5*Hp.
    acc = jnp.einsum("blf,fh->blh", p.astype(jnp.bfloat16), wstack_ref[...],
                     preferred_element_type=jnp.float32)         # (Bb, L, Hp) f32

    # Conv bias + ReLU in f32, lane-dense store.
    o_ref[...] = jnp.maximum(acc + bconv_ref[...], 0.0).astype(o_ref.dtype)


def _pick_block_b(batch, seq_len, target_rows=512):
    """Largest divisor of `batch` keeping the matmul M-dim (Bb*L) <= target_rows."""
    best = 1
    for bb in range(1, batch + 1):
        if batch % bb == 0 and bb * seq_len <= max(target_rows, seq_len):
            best = bb
    return best


def ncnn_forward(x, w_lin, b_lin, w_conv, b_conv):
    """Forward pass of the `ncnn` module.

    x      : (B, L, E) float32 embeddings (output of modules.prepare_input)
    w_lin  : (H, E)    torch nn.Linear weight
    b_lin  : (H,)      torch nn.Linear bias
    w_conv : (H, H, K) torch nn.Conv1d weight (out, in, k)
    b_conv : (H,)      torch nn.Conv1d bias
    returns: (B, L, H) in x.dtype
    """
    B, L, E = x.shape
    H = w_lin.shape[0]
    out_dtype = x.dtype
    Hp = max(LANE, _round_up(H, LANE))        # lane-dense hidden width

    # ---- one-time weight prep (outside the kernel) ----
    wlin_p = jnp.zeros((E, Hp), jnp.float32).at[:, :H].set(w_lin.T)
    blin_p = jnp.zeros((1, Hp), jnp.float32).at[0, :H].set(b_lin)
    wstack = jnp.zeros((KSIZE * Hp, Hp), jnp.float32)
    for k in range(KSIZE):
        wstack = wstack.at[k * Hp:k * Hp + H, :H].set(w_conv[:, :, k].T)
    bconv_p = jnp.zeros((1, Hp), jnp.float32).at[0, :H].set(b_conv)

    # bf16 MXU operands (f32 accumulation happens inside the kernel).
    x_b = x.astype(jnp.bfloat16)
    wlin_b = wlin_p.astype(jnp.bfloat16)
    wstack_b = wstack.astype(jnp.bfloat16)

    Bb = _pick_block_b(B, L)
    grid = (B // Bb,)

    # VMEM budget from the actual block sizes (double-buffered pipeline) plus
    # in-kernel live values; clamp to sensible limits (<= 64 MiB for v7x).
    bf16, f32 = 2, 4
    est = (
        2 * Bb * L * E * bf16                        # x blocks
        + 2 * Bb * L * Hp * f32                      # output blocks
        + 2 * (E * Hp + KSIZE * Hp * Hp) * bf16      # weights
        + 2 * 2 * Hp * f32                           # biases
        + Bb * (L + PAD) * Hp * f32                  # padded sequence value
        + Bb * L * KSIZE * Hp * (f32 + bf16)         # im2col slab (+ bf16 cast)
        + 2 * Bb * L * Hp * f32                      # h, acc
    )
    vmem_limit = int(min(max(2 * est, 32 * 1024 * 1024), 64 * 1024 * 1024))

    out_padded = pl.pallas_call(
        ncnn_kernel,
        out_shape=jax.ShapeDtypeStruct((B, L, Hp), out_dtype),
        grid_spec=pltpu.PrefetchScalarGridSpec(
            num_scalar_prefetch=0,
            grid=grid,
            in_specs=[
                pl.BlockSpec((Bb, L, E), lambda b: (b, 0, 0)),
                # Grid-invariant weights/biases (constant index maps).  At
                # production H these could be single-buffered (pl.Buffered(1))
                # to halve their VMEM footprint; irrelevant at these sizes.
                pl.BlockSpec((E, Hp), lambda b: (0, 0)),
                pl.BlockSpec((1, Hp), lambda b: (0, 0)),
                pl.BlockSpec((KSIZE * Hp, Hp), lambda b: (0, 0)),
                pl.BlockSpec((1, Hp), lambda b: (0, 0)),
            ],
            out_specs=pl.BlockSpec((Bb, L, Hp), lambda b: (b, 0, 0)),
        ),
        compiler_params=pltpu.CompilerParams(
            dimension_semantics=("parallel",),
            vmem_limit_bytes=vmem_limit,
        ),
    )(x_b, wlin_b, blin_p, wstack_b, bconv_p)

    # Slice off the lane padding outside the kernel.
    return out_padded[:, :, :H]


def ncnn_reference(x, w_lin, b_lin, w_conv, b_conv):
    """Pure-JAX f32 reference mirroring the PyTorch forward (torch weight layouts)."""
    B, L, _ = x.shape
    H = w_lin.shape[0]
    h = jnp.einsum("ble,he->blh", x, w_lin) + b_lin
    padded = jnp.concatenate([jnp.zeros((B, PAD, H), h.dtype), h], axis=1)
    out = jnp.zeros((B, L, H), h.dtype) + b_conv
    for k in range(KSIZE):
        out = out + jnp.einsum("bli,oi->blo", padded[:, k:k + L, :], w_conv[:, :, k])
    return jnp.maximum(out, 0.0)


if __name__ == "__main__":
    # Small shapes consistent with the module: embed_dim != hidden_dim so the
    # `transfer` Linear is active; Conv1d(hidden, hidden, 5) over the sequence.
    # TODO(synk): modules.prepare_input / the embedding lookup of the original
    # forward are outside this module's compute; the kernel starts from `vec`.
    B, L, E, H = 2, 8, 16, 32

    key = jax.random.PRNGKey(0)
    k_x, k_wl, k_bl, k_wc, k_bc = jax.random.split(key, 5)

    x = jax.random.normal(k_x, (B, L, E), dtype=jnp.float32)
    w_lin = jax.random.normal(k_wl, (H, E), dtype=jnp.float32) * 0.1   # torch (out, in)
    b_lin = jax.random.normal(k_bl, (H,), dtype=jnp.float32) * 0.1
    w_conv = jax.random.normal(k_wc, (H, H, KSIZE), dtype=jnp.float32) * 0.1  # (out,in,k)
    b_conv = jax.random.normal(k_bc, (H,), dtype=jnp.float32) * 0.1

    out = jax.block_until_ready(ncnn_forward(x, w_lin, b_lin, w_conv, b_conv))
    ref = jax.block_until_ready(ncnn_reference(x, w_lin, b_lin, w_conv, b_conv))

    # bf16 MXU operands with f32 accumulation -> relaxed tolerance vs. f32 reference.
    np.testing.assert_allclose(np.asarray(out), np.asarray(ref), rtol=2e-2, atol=3e-2)

    print("KERNEL_OK")
</pallas_src>

<mosaic_0001>
module attributes {stable_mosaic.version = 11 : i64} {
  func.func @ncnn_kernel(%arg0: i32, %arg1: memref<2x8x16xbf16, #tpu.memory_space<vmem>>, %arg2: memref<16x128xbf16, #tpu.memory_space<vmem>>, %arg3: memref<1x128xf32, #tpu.memory_space<vmem>>, %arg4: memref<640x128xbf16, #tpu.memory_space<vmem>>, %arg5: memref<1x128xf32, #tpu.memory_space<vmem>>, %arg6: memref<2x8x128xf32, #tpu.memory_space<vmem>>) attributes {dimension_semantics = [#tpu.dimension_semantics<parallel>], iteration_bounds = array<i64: 1>, scalar_prefetch = 0 : i64, scratch_operands = 0 : i64, tpu.core_type = #tpu.core_type<tc>, window_params = [{transform_indices = @transform_0, window_bounds = array<i64: 2, 8, 16>}, {pipeline_mode = #tpu.pipeline_mode<synchronous>, transform_indices = @transform_1, window_bounds = array<i64: 16, 128>}, {pipeline_mode = #tpu.pipeline_mode<synchronous>, transform_indices = @transform_2, window_bounds = array<i64: 1, 128>}, {pipeline_mode = #tpu.pipeline_mode<synchronous>, transform_indices = @transform_3, window_bounds = array<i64: 640, 128>}, {pipeline_mode = #tpu.pipeline_mode<synchronous>, transform_indices = @transform_4, window_bounds = array<i64: 1, 128>}, {transform_indices = @transform_5, window_bounds = array<i64: 2, 8, 128>}]} {
    %c0 = arith.constant 0 : index
    %c0_0 = arith.constant 0 : index
    %c0_1 = arith.constant 0 : index
    %0 = vector.load %arg1[%c0, %c0_0, %c0_1] : memref<2x8x16xbf16, #tpu.memory_space<vmem>>, vector<2x8x16xbf16>
    %c0_2 = arith.constant 0 : index
    %c0_3 = arith.constant 0 : index
    %1 = vector.load %arg2[%c0_2, %c0_3] : memref<16x128xbf16, #tpu.memory_space<vmem>>, vector<16x128xbf16>
    "tpu.trace_start"() <{level = 10 : i32, message = "ble,eh->blh"}> : () -> ()
    %cst = arith.constant dense<0.000000e+00> : vector<2x8x128xf32>
    %2 = tpu.matmul %0, %1, %cst {dimension_numbers = #tpu.dot_dimension_numbers<[2], [0], [0, 1], [1], [0, 0, 0, 1, 1, 1], [], []>} : vector<2x8x16xbf16>, vector<16x128xbf16>, vector<2x8x128xf32> -> vector<2x8x128xf32>
    "tpu.trace_stop"() : () -> ()
    %c0_4 = arith.constant 0 : index
    %c0_5 = arith.constant 0 : index
    %3 = vector.load %arg3[%c0_4, %c0_5] : memref<1x128xf32, #tpu.memory_space<vmem>>, vector<1x128xf32>
    %4 = vector.shape_cast %3 : vector<1x128xf32> to vector<1x1x128xf32>
    %5 = vector.broadcast %4 : vector<1x1x128xf32> to vector<2x8x128xf32>
    %6 = arith.addf %2, %5 : vector<2x8x128xf32>
    %cst_6 = arith.constant 0.000000e+00 : f32
    %7 = vector.broadcast %cst_6 : f32 to vector<2x4x128xf32>
    %8 = tpu.concatenate %7, %6 in 1 : vector<2x4x128xf32>, vector<2x8x128xf32> -> vector<2x12x128xf32>
    %9 = vector.extract_strided_slice %8 {offsets = [0, 0, 0], sizes = [2, 8, 128], strides = [1, 1, 1]} : vector<2x12x128xf32> to vector<2x8x128xf32>
    %10 = vector.extract_strided_slice %8 {offsets = [0, 1, 0], sizes = [2, 8, 128], strides = [1, 1, 1]} : vector<2x12x128xf32> to vector<2x8x128xf32>
    %11 = vector.extract_strided_slice %8 {offsets = [0, 2, 0], sizes = [2, 8, 128], strides = [1, 1, 1]} : vector<2x12x128xf32> to vector<2x8x128xf32>
    %12 = vector.extract_strided_slice %8 {offsets = [0, 3, 0], sizes = [2, 8, 128], strides = [1, 1, 1]} : vector<2x12x128xf32> to vector<2x8x128xf32>
    %13 = vector.extract_strided_slice %8 {offsets = [0, 4, 0], sizes = [2, 8, 128], strides = [1, 1, 1]} : vector<2x12x128xf32> to vector<2x8x128xf32>
    %14 = tpu.concatenate %9, %10, %11, %12, %13 in 2 : vector<2x8x128xf32>, vector<2x8x128xf32>, vector<2x8x128xf32>, vector<2x8x128xf32>, vector<2x8x128xf32> -> vector<2x8x640xf32>
    %15 = arith.truncf %14 : vector<2x8x640xf32> to vector<2x8x640xbf16>
    %c0_7 = arith.constant 0 : index
    %c0_8 = arith.constant 0 : index
    %16 = vector.load %arg4[%c0_7, %c0_8] : memref<640x128xbf16, #tpu.memory_space<vmem>>, vector<640x128xbf16>
    "tpu.trace_start"() <{level = 10 : i32, message = "blf,fh->blh"}> : () -> ()
    %cst_9 = arith.constant dense<0.000000e+00> : vector<2x8x128xf32>
    %17 = tpu.matmul %15, %16, %cst_9 {dimension_numbers = #tpu.dot_dimension_numbers<[2], [0], [0, 1], [1], [0, 0, 0, 1, 1, 1], [], []>} : vector<2x8x640xbf16>, vector<640x128xbf16>, vector<2x8x128xf32> -> vector<2x8x128xf32>
    "tpu.trace_stop"() : () -> ()
    %c0_10 = arith.constant 0 : index
    %c0_11 = arith.constant 0 : index
    %18 = vector.load %arg5[%c0_10, %c0_11] : memref<1x128xf32, #tpu.memory_space<vmem>>, vector<1x128xf32>
    %19 = vector.shape_cast %18 : vector<1x128xf32> to vector<1x1x128xf32>
    %20 = vector.broadcast %19 : vector<1x1x128xf32> to vector<2x8x128xf32>
    %21 = arith.addf %17, %20 : vector<2x8x128xf32>
    %cst_12 = arith.constant 0.000000e+00 : f32
    %22 = vector.broadcast %cst_12 : f32 to vector<2x8x128xf32>
    %23 = arith.maximumf %21, %22 : vector<2x8x128xf32>
    %c0_13 = arith.constant 0 : index
    %c0_14 = arith.constant 0 : index
    %c0_15 = arith.constant 0 : index
    %24 = vector.load %arg6[%c0_13, %c0_14, %c0_15] : memref<2x8x128xf32, #tpu.memory_space<vmem>>, vector<2x8x128xf32>
    tpu.vector_store %arg6[%c0_13, %c0_14, %c0_15], %23 {strides = array<i32>} : memref<2x8x128xf32, #tpu.memory_space<vmem>>, vector<2x8x128xf32>,
    return
  }
  func.func @transform_0(%arg0: i32) -> (i32, i32, i32) {
    %c0_i32 = arith.constant 0 : i32
    %c0_i32_0 = arith.constant 0 : i32
    %c0_i32_1 = arith.constant 0 : i32
    return %arg0, %c0_i32, %c0_i32_0 : i32, i32, i32
  }
  func.func @transform_1(%arg0: i32) -> (i32, i32) {
    %c0_i32 = arith.constant 0 : i32
    %c0_i32_0 = arith.constant 0 : i32
    %c0_i32_1 = arith.constant 0 : i32
    return %c0_i32, %c0_i32_0 : i32, i32
  }
  func.func @transform_2(%arg0: i32) -> (i32, i32) {
    %c0_i32 = arith.constant 0 : i32
    %c0_i32_0 = arith.constant 0 : i32
    %c0_i32_1 = arith.constant 0 : i32
    return %c0_i32, %c0_i32_0 : i32, i32
  }
  func.func @transform_3(%arg0: i32) -> (i32, i32) {
    %c0_i32 = arith.constant 0 : i32
    %c0_i32_0 = arith.constant 0 : i32
    %c0_i32_1 = arith.constant 0 : i32
    return %c0_i32, %c0_i32_0 : i32, i32
  }
  func.func @transform_4(%arg0: i32) -> (i32, i32) {
    %c0_i32 = arith.constant 0 : i32
    %c0_i32_0 = arith.constant 0 : i32
    %c0_i32_1 = arith.constant 0 : i32
    return %c0_i32, %c0_i32_0 : i32, i32
  }
  func.func @transform_5(%arg0: i32) -> (i32, i32, i32) {
    %c0_i32 = arith.constant 0 : i32
    %c0_i32_0 = arith.constant 0 : i32
    %c0_i32_1 = arith.constant 0 : i32
    return %arg0, %c0_i32, %c0_i32_0 : i32, i32, i32
  }
}

</mosaic_0001>

<llo_original>
// kernel: tpu_custom_call.1
$region0: #{tpu_custom_call.1}
  #allocation0 [shape = 'u32[]', space=smem, size = 0x4, offset = 0x4, fixed_abs, tag = 'smem constant byte address 0x4 - core index']
  #allocation1 [shape = 'u32[72,128]{1,0:T(1,128)}', space=vmem, size = 0x9000, scoped, tag = 'internal scratch']
  %s0 = inlined_call_operand.hbm [shape: bf16[2,8,16], index: 0, kind: input, shape index: {}]
  %s1 = inlined_call_operand.hbm [shape: bf16[16,128], index: 1, kind: input, shape index: {}]
  %s2 = inlined_call_operand.vmem [shape: f32[1,128], index: 2, kind: input, shape index: {}]
  %s3 = inlined_call_operand.hbm [shape: bf16[640,128], index: 3, kind: input, shape index: {}]
  %s4 = inlined_call_operand.vmem [shape: f32[1,128], index: 4, kind: input, shape index: {}]
  %s5 = inlined_call_operand.hbm [shape: f32[2,8,128], index: 5, kind: output, shape index: {}]
  %s6 = sld [smem:[#allocation0]]
  $region42: #{tpu_custom_call.1} parent=0
    _
  %s8 = ssub.s32 1, %s6
  %s9 = scalar_select 0, %s8, %s6
  $region1: #{tpu_custom_call.1} parent=0
    #allocation2 [shape = 'u8[4096]{0}', space=vmem, size = 0x1000, scoped, tag = 'input window, operand 0, single buffered']
    #allocation3 [shape = 's32[1]{0}', space=sflag, size = 0x4, scoped, tag = 'scoped memory for tpu_custom_call.1']
    #allocation4 [shape = 's32[1]{0}', space=sflag, size = 0x4, scoped, tag = 'scoped memory for tpu_custom_call.1']
    #allocation5 [shape = 'u8[4096]{0}', space=vmem, size = 0x1000, scoped, tag = 'input window, operand 1, single buffered']
    #allocation6 [shape = 's32[1]{0}', space=sflag, size = 0x4, scoped, tag = 'scoped memory for tpu_custom_call.1']
    #allocation7 [shape = 'u8[163840]{0}', space=vmem, size = 0x28000, scoped, tag = 'input window, operand 3, single buffered']
    #allocation8 [shape = 'u8[8192]{0}', space=vmem, size = 0x2000, scoped, tag = 'output window, operand 0, single buffered']
    %10 = vsyncpa [#allocation3], 0
    %11 = vsyncpa [#allocation6], 0
    %12 = vsyncpa [#allocation4], 0
    // Predicated region
    $region2: #{tpu_custom_call.1} parent=1 // pred_check
      _
    $region3: #{tpu_custom_call.1} parent=1 // pred_check_branch
      %14 = sbr.rel (0) target = $region5
    $region4: #{tpu_custom_call.1} parent=1 // pred_region
      %16 = vsyncadd [#allocation3], 0
      %s17 = sshll.u32 %s0, 4
      %s18 = int_to_ptr.hbm [resolvable:$true] %s17
      %s19 = sshll.u32 [#allocation2], 4
      %s20 = int_to_ptr.vmem [resolvable:$true] %s19
      %25 = dma.hbm_to_vmem [thread:$0]  %s18, 128, %s20, [#allocation3], 64, 64, 4
    $region5: #{tpu_custom_call.1} parent=1 // pred_fallthru
      _
    // Predicated region
    $region6: #{tpu_custom_call.1} parent=1 // pred_check
      _
    $region7: #{tpu_custom_call.1} parent=1 // pred_check_branch
      %27 = sbr.rel (0) target = $region9
    $region8: #{tpu_custom_call.1} parent=1 // pred_region
      %29 = vsyncadd [#allocation6], 0
      %s30 = sshll.u32 %s1, 4
      %s31 = int_to_ptr.hbm [resolvable:$true] %s30
      %s32 = sshll.u32 [#allocation5], 4
      %s33 = int_to_ptr.vmem [resolvable:$true] %s32
      %38 = dma.hbm_to_vmem [thread:$0]  %s31, 128, %s33, [#allocation6], 64, 64, 4
    $region9: #{tpu_custom_call.1} parent=1 // pred_fallthru
      _
    // Predicated region
    $region10: #{tpu_custom_call.1} parent=1 // pred_check
      _
    $region11: #{tpu_custom_call.1} parent=1 // pred_check_branch
      %40 = sbr.rel (0) target = $region13
    $region12: #{tpu_custom_call.1} parent=1 // pred_region
      _
    $region13: #{tpu_custom_call.1} parent=1 // pred_fallthru
      _
    // Predicated region
    $region14: #{tpu_custom_call.1} parent=1 // pred_check
      _
    $region15: #{tpu_custom_call.1} parent=1 // pred_check_branch
      %42 = sbr.rel (0) target = $region17
    $region16: #{tpu_custom_call.1} parent=1 // pred_region
      %44 = vsyncadd [#allocation6], 0
      %s45 = sshll.u32 %s3, 4
      %s46 = int_to_ptr.hbm [resolvable:$true] %s45
      %s47 = sshll.u32 [#allocation7], 4
      %s48 = int_to_ptr.vmem [resolvable:$true] %s47
      %53 = dma.hbm_to_vmem [thread:$0]  %s46, 5120, %s48, [#allocation6], 64, 64, 4
    $region17: #{tpu_custom_call.1} parent=1 // pred_fallthru
      _
    // Predicated region
    $region18: #{tpu_custom_call.1} parent=1 // pred_check
      _
    $region19: #{tpu_custom_call.1} parent=1 // pred_check_branch
      %55 = sbr.rel (0) target = $region21
    $region20: #{tpu_custom_call.1} parent=1 // pred_region
      _
    $region21: #{tpu_custom_call.1} parent=1 // pred_fallthru
      _
    // Predicated region
    $region22: #{tpu_custom_call.1} parent=1 // pred_check
      _
    $region23: #{tpu_custom_call.1} parent=1 // pred_check_branch
      %57 = sbr.rel (0) target = $region25
    $region24: #{tpu_custom_call.1} parent=1 // pred_region
      %59 = dma.done [#allocation3], 128
    $region25: #{tpu_custom_call.1} parent=1 // pred_fallthru
      _
    // Predicated region
    $region26: #{tpu_custom_call.1} parent=1 // pred_check
      _
    $region27: #{tpu_custom_call.1} parent=1 // pred_check_branch
      %61 = sbr.rel (0) target = $region29
    $region28: #{tpu_custom_call.1} parent=1 // pred_region
      %63 = dma.done [#allocation6], 128
    $region29: #{tpu_custom_call.1} parent=1 // pred_fallthru
      _
    // Predicated region
    $region30: #{tpu_custom_call.1} parent=1 // pred_check
      _
    $region31: #{tpu_custom_call.1} parent=1 // pred_check_branch
      %65 = sbr.rel (0) target = $region33
    $region32: #{tpu_custom_call.1} parent=1 // pred_region
      %67 = dma.done [#allocation6], 5120
    $region33: #{tpu_custom_call.1} parent=1 // pred_fallthru
      _
    %v69 = vld [vmem:[#allocation2] sm:$0xf]
    %v70 = vld [vmem:[#allocation2 + $0x4] sm:$0xf]
    %v71 = vld [vmem:[#allocation5] sm:$0xf]
    %v72 = vld [vmem:[#allocation5 + $0x4] sm:$0xf]
    %v73 = vld [vmem:[%s2] sm:$0x1]
    %v75 = vperm.slane %v73, 0
    %v79 = vunpack.c.l.b16 %v69
    %v80 = vunpack.c.l.b16 %v70
    %v81 = vpack.c.b16 %v80, %v79
    %v84 = vunpack.c.l.b16 %v71
    %v85 = vunpack.c.l.b16 %v72
    %v86 = vpack.c.b16 %v85, %v84
    %vm88 = vcmask 130048
    %v90 = vsel %vm88, %v81, 0
    %92 = vmatpush.bf16.msra.mxu0 0
    %93 = vmatpush.bf16.msra.mxu0 0
    %94 = vmatpush.bf16.msra.mxu0 0
    %95 = vmatpush.bf16.msra.mxu0 0
    %96 = vmatpush.bf16.msra.mxu0 0
    %97 = vmatpush.bf16.msra.mxu0 0
    %98 = vmatpush.bf16.msra.mxu0 0
    %99 = vmatpush.bf16.msra.mxu0 %v86
    %100 = vmatmul.bf16.gmra.mxu0 %v90
    %v101 = vpop.f32.mrf.mxu0
    %v102 = vadd.f32 %v75, %v101
    %v103 = vpop.f32.mrf.mxu0
    %v104 = vadd.f32 %v75, %v103
    %105 = vdwg.mxu0
    %v108 = vrot.slane %v102, 4
    %v109 = vrot.slane %v104, 4
    %vm112 = vcmask 1043456
    %v113 = vsel %vm112, 0.0, %v108
    %v114 = vsel %vm112, 0.0, %v109
    %vm117 = vcmask 1046528
    %v118 = vrot.slane %v113, 1
    %v119 = vrot.slane %v108, 1
    %v120 = vsel %vm117, %v118, %v119
    %v121 = vrot.slane %v114, 1
    %v122 = vrot.slane %v109, 1
    %v123 = vsel %vm117, %v121, %v122
    %vm126 = vcmask 1045504
    %v127 = vrot.slane %v113, 2
    %v128 = vrot.slane %v108, 2
    %v129 = vsel %vm126, %v127, %v128
    %v130 = vrot.slane %v114, 2
    %v131 = vrot.slane %v109, 2
    %v132 = vsel %vm126, %v130, %v131
    %vm135 = vcmask 1044480
    %v136 = vrot.slane %v113, 3
    %v137 = vrot.slane %v108, 3
    %v138 = vsel %vm135, %v136, %v137
    %v139 = vrot.slane %v114, 3
    %v140 = vrot.slane %v109, 3
    %v141 = vsel %vm135, %v139, %v140
    %v144 = vrot.slane %v113, 4
    %v145 = vrot.slane %v108, 4
    %v146 = vsel %vm112, %v144, %v145
    %v147 = vrot.slane %v114, 4
    %v148 = vrot.slane %v109, 4
    %v149 = vsel %vm112, %v147, %v148
    %v152 = vpack.c.bf16 %v120, %v113
    %v153 = vpack.c.bf16 %v138, %v129
    %v154 = vpack.c.bf16 %v146, %v146
    %v155 = vpack.c.bf16 %v123, %v114
    %v156 = vpack.c.bf16 %v141, %v132
    %v157 = vpack.c.bf16 %v149, %v149
    %v158 = vld [vmem:[#allocation7] sm:$0xf]
    %v159 = vld [vmem:[#allocation7 + $0x4] sm:$0xf]
    %v160 = vld [vmem:[#allocation7 + $0x8] sm:$0xf]
    %v161 = vld [vmem:[#allocation7 + $0xc] sm:$0xf]
    %v162 = vld [vmem:[#allocation7 + $0x10] sm:$0xf]
    %v163 = vld [vmem:[#allocation7 + $0x14] sm:$0xf]
    %v164 = vld [vmem:[#allocation7 + $0x18] sm:$0xf]
    %v165 = vld [vmem:[#allocation7 + $0x1c] sm:$0xf]
    %v166 = vld [vmem:[#allocation7 + $0x20] sm:$0xf]
    %v167 = vld [vmem:[#allocation7 + $0x24] sm:$0xf]
    %v168 = vld [vmem:[#allocation7 + $0x28] sm:$0xf]
    %v169 = vld [vmem:[#allocation7 + $0x2c] sm:$0xf]
    %v170 = vld [vmem:[#allocation7 + $0x30] sm:$0xf]
    %v171 = vld [vmem:[#allocation7 + $0x34] sm:$0xf]
    %v172 = vld [vmem:[#allocation7 + $0x38] sm:$0xf]
    %v173 = vld [vmem:[#allocation7 + $0x3c] sm:$0xf]
    %v174 = vld [vmem:[#allocation7 + $0x40] sm:$0xf]
    %v175 = vld [vmem:[#allocation7 + $0x44] sm:$0xf]
    %v176 = vld [vmem:[#allocation7 + $0x48] sm:$0xf]
    %v177 = vld [vmem:[#allocation7 + $0x4c] sm:$0xf]
    %v178 = vld [vmem:[#allocation7 + $0x50] sm:$0xf]
    %v179 = vld [vmem:[#allocation7 + $0x54] sm:$0xf]
    %v180 = vld [vmem:[#allocation7 + $0x58] sm:$0xf]
    %v181 = vld [vmem:[#allocation7 + $0x5c] sm:$0xf]
    %v182 = vld [vmem:[#allocation7 + $0x60] sm:$0xf]
    %v183 = vld [vmem:[#allocation7 + $0x64] sm:$0xf]
    %v184 = vld [vmem:[#allocation7 + $0x68] sm:$0xf]
    %v185 = vld [vmem:[#allocation7 + $0x6c] sm:$0xf]
    %v186 = vld [vmem:[#allocation7 + $0x70] sm:$0xf]
    %v187 = vld [vmem:[#allocation7 + $0x74] sm:$0xf]
    %v188 = vld [vmem:[#allocation7 + $0x78] sm:$0xf]
    %v189 = vld [vmem:[#allocation7 + $0x7c] sm:$0xf]
    %v190 = vld [vmem:[#allocation7 + $0x80] sm:$0xf]
    %v191 = vld [vmem:[#allocation7 + $0x84] sm:$0xf]
    %v192 = vld [vmem:[#allocation7 + $0x88] sm:$0xf]
    %v193 = vld [vmem:[#allocation7 + $0x8c] sm:$0xf]
    %v194 = vld [vmem:[#allocation7 + $0x90] sm:$0xf]
    %v195 = vld [vmem:[#allocation7 + $0x94] sm:$0xf]
    %v196 = vld [vmem:[#allocation7 + $0x98] sm:$0xf]
    %v197 = vld [vmem:[#allocation7 + $0x9c] sm:$0xf]
    %v198 = vld [vmem:[#allocation7 + $0xa0] sm:$0xf]
    %v199 = vld [vmem:[#allocation7 + $0xa4] sm:$0xf]
    %v200 = vld [vmem:[#allocation7 + $0xa8] sm:$0xf]
    %v201 = vld [vmem:[#allocation7 + $0xac] sm:$0xf]
    %v202 = vld [vmem:[#allocation7 + $0xb0] sm:$0xf]
    %v203 = vld [vmem:[#allocation7 + $0xb4] sm:$0xf]
    %v204 = vld [vmem:[#allocation7 + $0xb8] sm:$0xf]
    %v205 = vld [vmem:[#allocation7 + $0xbc] sm:$0xf]
    %v206 = vld [vmem:[#allocation7 + $0xc0] sm:$0xf]
    %v207 = vld [vmem:[#allocation7 + $0xc4] sm:$0xf]
    %v208 = vld [vmem:[#allocation7 + $0xc8] sm:$0xf]
    %v209 = vld [vmem:[#allocation7 + $0xcc] sm:$0xf]
    %v210 = vld [vmem:[#allocation7 + $0xd0] sm:$0xf]
    %v211 = vld [vmem:[#allocation7 + $0xd4] sm:$0xf]
    %v212 = vld [vmem:[#allocation7 + $0xd8] sm:$0xf]
    %v213 = vld [vmem:[#allocation7 + $0xdc] sm:$0xf]
    %v214 = vld [vmem:[#allocation7 + $0xe0] sm:$0xf]
    %v215 = vld [vmem:[#allocation7 + $0xe4] sm:$0xf]
    %v216 = vld [vmem:[#allocation7 + $0xe8] sm:$0xf]
    %v217 = vld [vmem:[#allocation7 + $0xec] sm:$0xf]
    %v218 = vld [vmem:[#allocation7 + $0xf0] sm:$0xf]
    %v219 = vld [vmem:[#allocation7 + $0xf4] sm:$0xf]
    %v220 = vld [vmem:[#allocation7 + $0xf8] sm:$0xf]
    %v221 = vld [vmem:[#allocation7 + $0xfc] sm:$0xf]
    %v222 = vld [vmem:[#allocation7 + $0x100] sm:$0xf]
    %v223 = vld [vmem:[#allocation7 + $0x104] sm:$0xf]
    %v224 = vld [vmem:[#allocation7 + $0x108] sm:$0xf]
    %v225 = vld [vmem:[#allocation7 + $0x10c] sm:$0xf]
    %v226 = vld [vmem:[#allocation7 + $0x110] sm:$0xf]
    %v227 = vld [vmem:[#allocation7 + $0x114] sm:$0xf]
    %v228 = vld [vmem:[#allocation7 + $0x118] sm:$0xf]
    %v229 = vld [vmem:[#allocation7 + $0x11c] sm:$0xf]
    %v230 = vld [vmem:[#allocation7 + $0x120] sm:$0xf]
    %v231 = vld [vmem:[#allocation7 + $0x124] sm:$0xf]
    %v232 = vld [vmem:[#allocation7 + $0x128] sm:$0xf]
    %v233 = vld [vmem:[#allocation7 + $0x12c] sm:$0xf]
    %v234 = vld [vmem:[#allocation7 + $0x130] sm:$0xf]
    %v235 = vld [vmem:[#allocation7 + $0x134] sm:$0xf]
    %v236 = vld [vmem:[#allocation7 + $0x138] sm:$0xf]
    %v237 = vld [vmem:[#allocation7 + $0x13c] sm:$0xf]
    %v238 = vld [vmem:[%s4] sm:$0x1]
    %v240 = vperm.slane %v238, 0
    %v248 = vunpack.c.l.b16 %v152
    %v249 = vunpack.c.h.b16 %v152
    %v250 = vunpack.c.l.b16 %v153
    %v251 = vunpack.c.h.b16 %v153
    %v252 = vunpack.c.l.b16 %v154
    %v253 = vunpack.c.l.b16 %v155
    %v254 = vunpack.c.h.b16 %v155
    %v255 = vunpack.c.l.b16 %v156
    %v256 = vunpack.c.h.b16 %v156
    %v257 = vunpack.c.l.b16 %v157
    %v258 = vpack.c.b16 %v253, %v248
    %v259 = vpack.c.b16 %v254, %v249
    %v260 = vpack.c.b16 %v255, %v250
    %v261 = vpack.c.b16 %v256, %v251
    %v262 = vpack.c.b16 %v257, %v252
    %v348 = vunpack.c.l.b16 %v158
    %v349 = vunpack.c.l.b16 %v159
    %v350 = vunpack.c.l.b16 %v160
    %v351 = vunpack.c.l.b16 %v161
    %v352 = vunpack.c.l.b16 %v162
    %v353 = vunpack.c.l.b16 %v163
    %v354 = vunpack.c.l.b16 %v164
    %v355 = vunpack.c.l.b16 %v165
    %v356 = vunpack.c.l.b16 %v166
    %v357 = vunpack.c.l.b16 %v167
    %v358 = vunpack.c.l.b16 %v168
    %v359 = vunpack.c.l.b16 %v169
    %v360 = vunpack.c.l.b16 %v170
    %v361 = vunpack.c.l.b16 %v171
    %v362 = vunpack.c.l.b16 %v172
    %v363 = vunpack.c.l.b16 %v173
    %v364 = vunpack.c.l.b16 %v174
    %v365 = vunpack.c.l.b16 %v175
    %v366 = vunpack.c.l.b16 %v176
    %v367 = vunpack.c.l.b16 %v177
    %v368 = vunpack.c.l.b16 %v178
    %v369 = vunpack.c.l.b16 %v179
    %v370 = vunpack.c.l.b16 %v180
    %v371 = vunpack.c.l.b16 %v181
    %v372 = vunpack.c.l.b16 %v182
    %v373 = vunpack.c.l.b16 %v183
    %v374 = vunpack.c.l.b16 %v184
    %v375 = vunpack.c.l.b16 %v185
    %v376 = vunpack.c.l.b16 %v186
    %v377 = vunpack.c.l.b16 %v187
    %v378 = vunpack.c.l.b16 %v188
    %v379 = vunpack.c.l.b16 %v189
    %v380 = vunpack.c.l.b16 %v190
    %v381 = vunpack.c.l.b16 %v191
    %v382 = vunpack.c.l.b16 %v192
    %v383 = vunpack.c.l.b16 %v193
    %v384 = vunpack.c.l.b16 %v194
    %v385 = vunpack.c.l.b16 %v195
    %v386 = vunpack.c.l.b16 %v196
    %v387 = vunpack.c.l.b16 %v197
    %v388 = vunpack.c.l.b16 %v198
    %v389 = vunpack.c.l.b16 %v199
    %v390 = vunpack.c.l.b16 %v200
    %v391 = vunpack.c.l.b16 %v201
    %v392 = vunpack.c.l.b16 %v202
    %v393 = vunpack.c.l.b16 %v203
    %v394 = vunpack.c.l.b16 %v204
    %v395 = vunpack.c.l.b16 %v205
    %v396 = vunpack.c.l.b16 %v206
    %v397 = vunpack.c.l.b16 %v207
    %v398 = vunpack.c.l.b16 %v208
    %v399 = vunpack.c.l.b16 %v209
    %v400 = vunpack.c.l.b16 %v210
    %v401 = vunpack.c.l.b16 %v211
    %v402 = vunpack.c.l.b16 %v212
    %v403 = vunpack.c.l.b16 %v213
    %v404 = vunpack.c.l.b16 %v214
    %v405 = vunpack.c.l.b16 %v215
    %v406 = vunpack.c.l.b16 %v216
    %v407 = vunpack.c.l.b16 %v217
    %v408 = vunpack.c.l.b16 %v218
    %v409 = vunpack.c.l.b16 %v219
    %v410 = vunpack.c.l.b16 %v220
    %v411 = vunpack.c.l.b16 %v221
    %v412 = vunpack.c.l.b16 %v222
    %v413 = vunpack.c.l.b16 %v223
    %v414 = vunpack.c.l.b16 %v224
    %v415 = vunpack.c.l.b16 %v225
    %v416 = vunpack.c.l.b16 %v226
    %v417 = vunpack.c.l.b16 %v227
    %v418 = vunpack.c.l.b16 %v228
    %v419 = vunpack.c.l.b16 %v229
    %v420 = vunpack.c.l.b16 %v230
    %v421 = vunpack.c.l.b16 %v231
    %v422 = vunpack.c.l.b16 %v232
    %v423 = vunpack.c.l.b16 %v233
    %v424 = vunpack.c.l.b16 %v234
    %v425 = vunpack.c.l.b16 %v235
    %v426 = vunpack.c.l.b16 %v236
    %v427 = vunpack.c.l.b16 %v237
    %v428 = vpack.c.b16 %v349, %v348
    %v429 = vpack.c.b16 %v351, %v350
    %v430 = vpack.c.b16 %v353, %v352
    %v431 = vpack.c.b16 %v355, %v354
    %v432 = vpack.c.b16 %v357, %v356
    %v433 = vpack.c.b16 %v359, %v358
    %v434 = vpack.c.b16 %v361, %v360
    %v435 = vpack.c.b16 %v363, %v362
    %v436 = vpack.c.b16 %v365, %v364
    %v437 = vpack.c.b16 %v367, %v366
    %v438 = vpack.c.b16 %v369, %v368
    %v439 = vpack.c.b16 %v371, %v370
    %v440 = vpack.c.b16 %v373, %v372
    %v441 = vpack.c.b16 %v375, %v374
    %v442 = vpack.c.b16 %v377, %v376
    %v443 = vpack.c.b16 %v379, %v378
    %v444 = vpack.c.b16 %v381, %v380
    %v445 = vpack.c.b16 %v383, %v382
    %v446 = vpack.c.b16 %v385, %v384
    %v447 = vpack.c.b16 %v387, %v386
    %v448 = vpack.c.b16 %v389, %v388
    %v449 = vpack.c.b16 %v391, %v390
    %v450 = vpack.c.b16 %v393, %v392
    %v451 = vpack.c.b16 %v395, %v394
    %v452 = vpack.c.b16 %v397, %v396
    %v453 = vpack.c.b16 %v399, %v398
    %v454 = vpack.c.b16 %v401, %v400
    %v455 = vpack.c.b16 %v403, %v402
    %v456 = vpack.c.b16 %v405, %v404
    %v457 = vpack.c.b16 %v407, %v406
    %v458 = vpack.c.b16 %v409, %v408
    %v459 = vpack.c.b16 %v411, %v410
    %v460 = vpack.c.b16 %v413, %v412
    %v461 = vpack.c.b16 %v415, %v414
    %v462 = vpack.c.b16 %v417, %v416
    %v463 = vpack.c.b16 %v419, %v418
    %v464 = vpack.c.b16 %v421, %v420
    %v465 = vpack.c.b16 %v423, %v422
    %v466 = vpack.c.b16 %v425, %v424
    %v467 = vpack.c.b16 %v427, %v426
    %508 = vmatpush.bf16.msra.mxu0 %v435
    %509 = vmatpush.bf16.msra.mxu0 %v434
    %510 = vmatpush.bf16.msra.mxu0 %v433
    %511 = vmatpush.bf16.msra.mxu0 %v432
    %512 = vmatpush.bf16.msra.mxu0 %v431
    %513 = vmatpush.bf16.msra.mxu0 %v430
    %514 = vmatpush.bf16.msra.mxu0 %v429
    %515 = vmatpush.bf16.msra.mxu0 %v428
    %516 = vmatmul.bf16.gmra.mxu0 %v258
    %v517 = vpop.f32.mrf.mxu0
    %v518 = vadd.f32 %v240, %v517
    %v519 = vpop.f32.mrf.mxu0
    %v520 = vadd.f32 %v240, %v519
    %521 = vdwg.mxu0
    %522 = vmatpush.bf16.msra.mxu0 %v443
    %523 = vmatpush.bf16.msra.mxu0 %v442
    %524 = vmatpush.bf16.msra.mxu0 %v441
    %525 = vmatpush.bf16.msra.mxu0 %v440
    %526 = vmatpush.bf16.msra.mxu0 %v439
    %527 = vmatpush.bf16.msra.mxu0 %v438
    %528 = vmatpush.bf16.msra.mxu0 %v437
    %529 = vmatpush.bf16.msra.mxu0 %v436
    %530 = vmatmul.bf16.gmra.mxu0 %v259
    %v531 = vpop.f32.mrf.mxu0
    %v532 = vadd.f32 %v518, %v531
    %v533 = vpop.f32.mrf.mxu0
    %v534 = vadd.f32 %v520, %v533
    %535 = vdwg.mxu0
    %536 = vmatpush.bf16.msra.mxu0 %v451
    %537 = vmatpush.bf16.msra.mxu0 %v450
    %538 = vmatpush.bf16.msra.mxu0 %v449
    %539 = vmatpush.bf16.msra.mxu0 %v448
    %540 = vmatpush.bf16.msra.mxu0 %v447
    %541 = vmatpush.bf16.msra.mxu0 %v446
    %542 = vmatpush.bf16.msra.mxu0 %v445
    %543 = vmatpush.bf16.msra.mxu0 %v444
    %544 = vmatmul.bf16.gmra.mxu0 %v260
    %v545 = vpop.f32.mrf.mxu0
    %v546 = vadd.f32 %v532, %v545
    %v547 = vpop.f32.mrf.mxu0
    %v548 = vadd.f32 %v534, %v547
    %549 = vdwg.mxu0
    %550 = vmatpush.bf16.msra.mxu0 %v459
    %551 = vmatpush.bf16.msra.mxu0 %v458
    %552 = vmatpush.bf16.msra.mxu0 %v457
    %553 = vmatpush.bf16.msra.mxu0 %v456
    %554 = vmatpush.bf16.msra.mxu0 %v455
    %555 = vmatpush.bf16.msra.mxu0 %v454
    %556 = vmatpush.bf16.msra.mxu0 %v453
    %557 = vmatpush.bf16.msra.mxu0 %v452
    %558 = vmatmul.bf16.gmra.mxu0 %v261
    %v559 = vpop.f32.mrf.mxu0
    %v560 = vadd.f32 %v546, %v559
    %v561 = vpop.f32.mrf.mxu0
    %v562 = vadd.f32 %v548, %v561
    %563 = vdwg.mxu0
    %564 = vmatpush.bf16.msra.mxu0 %v467
    %565 = vmatpush.bf16.msra.mxu0 %v466
    %566 = vmatpush.bf16.msra.mxu0 %v465
    %567 = vmatpush.bf16.msra.mxu0 %v464
    %568 = vmatpush.bf16.msra.mxu0 %v463
    %569 = vmatpush.bf16.msra.mxu0 %v462
    %570 = vmatpush.bf16.msra.mxu0 %v461
    %571 = vmatpush.bf16.msra.mxu0 %v460
    %572 = vmatmul.bf16.gmra.mxu0 %v262
    %v573 = vpop.f32.mrf.mxu0
    %v574 = vadd.f32 %v560, %v573
    %v575 = vpop.f32.mrf.mxu0
    %v576 = vadd.f32 %v562, %v575
    %577 = vdwg.mxu0
    %v578 = vmax.f32 %v574, 0.0
    %v579 = vmax.f32 %v576, 0.0
    %580 = vst [vmem:[#allocation8] sm:$0xff] %v578
    %581 = vst [vmem:[#allocation8 + $0x8] sm:$0xff] %v579
    // Predicated region
    $region34: #{tpu_custom_call.1} parent=1 // pred_check
      _
    $region35: #{tpu_custom_call.1} parent=1 // pred_check_branch
      %583 = sbr.rel (0) target = $region37
    $region36: #{tpu_custom_call.1} parent=1 // pred_region
      %585 = vsyncadd [#allocation4], 0
      %s586 = sshll.u32 [#allocation8], 4
      %s587 = int_to_ptr.vmem [resolvable:$true] %s586
      %s588 = sshll.u32 %s5, 4
      %s589 = int_to_ptr.hbm [resolvable:$true] %s588
      %594 = dma.vmem_to_hbm [thread:$0]  %s587, 256, %s589, [#allocation4], 128, 128, 8
    $region37: #{tpu_custom_call.1} parent=1 // pred_fallthru
      _
    // Predicated region
    $region38: #{tpu_custom_call.1} parent=1 // pred_check
      _
    $region39: #{tpu_custom_call.1} parent=1 // pred_check_branch
      %596 = sbr.rel (0) target = $region41
    $region40: #{tpu_custom_call.1} parent=1 // pred_region
      %598 = dma.done [#allocation4], 256
    $region41: #{tpu_custom_call.1} parent=1 // pred_fallthru
      _
    %599 = vsyncpa [#allocation3], 1
    %600 = vsyncpa [#allocation6], 1
    %601 = vsyncpa [#allocation4], 1

</llo_original>
